<compile_context>
chip_gen: v5e
topology: v5e:2x2
jax: 0.10.0
libtpu: 0.0.40
codegen_flags: <defaults>
</compile_context>

<pallas_src>
import jax
import jax.numpy as jnp
from jax.experimental import pallas as pl
from jax.experimental.pallas import tpu as pltpu


def _lswish_kernel(beta_ref, x_ref, o_ref):
    # beta_ref: (1, LANE) resident row OR (TM, 1) per-tile column.
    # x_ref / o_ref: (TM, LANE).
    x = x_ref[...].astype(jnp.float32)
    b = beta_ref[...].astype(jnp.float32)
    # x * sigmoid(b*x) == 0.5 * x * (1 + tanh(0.5 * b * x)): one transcendental.
    o_ref[...] = (0.5 * x * (1.0 + jnp.tanh(0.5 * b * x))).astype(o_ref.dtype)


def _chip_vmem_config():
    """(target_bytes_per_tile, vmem_limit_bytes) sized per TPU generation."""
    target = 4 * 1024 * 1024
    limit = 32 * 1024 * 1024            # safe default (v7x has 64 MiB physical VMEM)
    try:
        phys = int(pltpu.get_tpu_info().vmem_capacity_bytes)
        # v5e/v6e: 128 MiB physical -> 64 MiB scoped; v7x: 64 MiB -> 32 MiB scoped.
        limit = min(64 * 1024 * 1024, max(32 * 1024 * 1024, phys // 2))
    except Exception:
        pass
    return target, limit


def _sublane_quantum(itemsize):
    # Sub-32-bit dtypes pack along sublanes: 8 for f32, 16 for bf16, 32 for int8/fp8.
    return max(8, 32 // max(1, itemsize))


def _pick_fold(n_rows, lane, lane_cap):
    """Fold factor f (divides n_rows): fold rows into lanes so the lane axis is
    >= 128 and, when possible, a multiple of 128 (unmasked vector stores)."""
    if n_rows <= 1 or lane <= 0 or lane > lane_cap or lane % 128 == 0:
        return 1
    best = 1
    f_max = min(n_rows, 1024, max(1, lane_cap // lane))
    for f in range(1, f_max + 1):
        if n_rows % f:
            continue
        w = f * lane
        if w % 128 == 0:
            return f                    # smallest fold giving an exact 128-multiple
        if w >= 512 and best == 1:
            best = f                    # otherwise: first fold giving a wide lane axis
    return best


def _pick_row_block(rows, lane, itemsize, *, target_bytes, min_grid=8):
    """Row-tile size: ~target_bytes per buffer, dtype-aware sublane quantum,
    and a grid that stays splittable across v7x's two TensorCores."""
    q = _sublane_quantum(itemsize)
    if rows <= 2 * q:
        return rows                     # tiny: single full-extent block (always legal)
    per_row = max(1, lane * itemsize)
    tm = max(q, (target_bytes // per_row) // q * q)
    cap = (rows // min_grid) // q * q   # aim for >= min_grid grid steps ...
    if cap < q:
        cap = (rows // 2) // q * q      # ... but always >= 2 when rows allow
    tm = min(tm, max(q, cap))
    return min(tm, rows)


def _run_rows(x2, beta2, tm, vmem_limit):
    """pallas_call over a (rows, lane) slab, row-tiled with tile height tm."""
    rows, lane = x2.shape
    grid = (pl.cdiv(rows, tm),)
    if beta2.shape == (rows, 1):
        beta_spec = pl.BlockSpec((tm, 1), lambda i: (i, 0))        # per-tile column
    else:
        beta_spec = pl.BlockSpec((1, lane), lambda i: (0, 0))      # resident row
    return pl.pallas_call(
        _lswish_kernel,
        out_shape=jax.ShapeDtypeStruct((rows, lane), x2.dtype),
        grid=grid,
        in_specs=[beta_spec,
                  pl.BlockSpec((tm, lane), lambda i: (i, 0))],
        out_specs=pl.BlockSpec((tm, lane), lambda i: (i, 0)),
        compiler_params=pltpu.CompilerParams(
            dimension_semantics=("parallel",),
            vmem_limit_bytes=vmem_limit),
    )(beta2, x2)


def lswish(x, beta):
    """LSwish forward. beta is a 1-D array, either shape (1,) or (C,); kept in f32."""
    x = jnp.asarray(x)
    beta = jnp.asarray(beta)                     # do NOT downcast to x.dtype
    itemsize = jnp.dtype(x.dtype).itemsize
    target_bytes, vmem_limit = _chip_vmem_config()
    q = _sublane_quantum(itemsize)
    lane_cap = max(128, target_bytes // (q * itemsize))

    if x.ndim == 2:
        N, C = x.shape
        beta_c = jnp.broadcast_to(beta.reshape(-1).astype(jnp.float32), (C,))
        pattern, lane0 = beta_c, C
    elif x.ndim == 4:
        N, C, H, W = x.shape
        HW = H * W
        beta_c = jnp.broadcast_to(beta.reshape(-1).astype(jnp.float32), (C,))
        pattern, lane0 = jnp.repeat(beta_c, HW), C * HW
    else:
        raise ValueError(f"LSwish expects 2-D or 4-D input, got ndim={x.ndim}")

    if x.ndim == 2 or lane0 <= lane_cap:
        # Lane-dense main path: rows = (folded) batch, lanes = full beta pattern.
        f = _pick_fold(N, lane0, lane_cap)
        rows, lane = N // f, f * lane0
        x2 = x.reshape(rows, lane)
        beta_row = jnp.tile(pattern, f).reshape(1, lane)
        tm = _pick_row_block(rows, lane, itemsize, target_bytes=target_bytes)
        out2 = _run_rows(x2, beta_row, tm, vmem_limit)
        return out2.reshape(x.shape)

    # Fallback (4-D with an extremely wide C*H*W): per-(n, c)-row layout + beta column.
    R = N * C
    x2 = x.reshape(R, HW)
    beta_col = jnp.broadcast_to(beta_c[None, :], (N, C)).reshape(R, 1)
    tm = _pick_row_block(R, HW, itemsize, target_bytes=target_bytes)
    out2 = _run_rows(x2, beta_col, tm, vmem_limit)
    return out2.reshape(N, C, H, W)


class LSwishPallas:
    """Mirror of the PyTorch LSwish module (deterministic init: beta = ones, fp32)."""

    def __init__(self, dim=-1):
        if dim > 0:
            self.beta = jnp.ones((dim,), dtype=jnp.float32)  # learnable param in torch
        else:
            self.beta = jnp.ones((1,), dtype=jnp.float32)    # buffer in torch

    def __call__(self, x):
        return lswish(x, self.beta)


def _reference(x, beta):
    x = jnp.asarray(x)
    beta = jnp.asarray(beta, dtype=jnp.float32)
    if x.ndim == 2:
        return (x * jax.nn.sigmoid(beta[None, :] * x)).astype(x.dtype)
    return (x * jax.nn.sigmoid(beta[None, :, None, None] * x)).astype(x.dtype)


if __name__ == "__main__":
    key = jax.random.PRNGKey(0)
    k1, k2, k3 = jax.random.split(key, 3)

    # 4-D case (NCHW), per-channel learnable beta (dim = C = 4).
    N, C, H, W = 2, 4, 16, 16
    x4 = jax.random.normal(k1, (N, C, H, W), dtype=jnp.float32)
    mod4 = LSwishPallas(dim=C)
    mod4.beta = 1.0 + 0.5 * jax.random.normal(k3, (C,), dtype=jnp.float32)
    out4 = jax.block_until_ready(mod4(x4))
    ref4 = _reference(x4, mod4.beta)
    assert out4.shape == (N, C, H, W)
    assert jnp.allclose(out4, ref4, atol=1e-5, rtol=1e-5), "4D mismatch"

    # 2-D case (N, C) with small C: exercises the lane-fold path (32 -> 128 lanes).
    x2 = jax.random.normal(k2, (8, 32), dtype=jnp.float32)
    mod2 = LSwishPallas(dim=-1)
    out2 = jax.block_until_ready(mod2(x2))
    ref2 = _reference(x2, mod2.beta)
    assert out2.shape == (8, 32)
    assert jnp.allclose(out2, ref2, atol=1e-5, rtol=1e-5), "2D mismatch"

    print("KERNEL_OK")
</pallas_src>

<mosaic_0001>
module attributes {stable_mosaic.version = 11 : i64} {
  func.func @_lswish_kernel(%arg0: i32, %arg1: memref<1x1024xf32, #tpu.memory_space<vmem>>, %arg2: memref<2x1024xf32, #tpu.memory_space<vmem>>, %arg3: memref<2x1024xf32, #tpu.memory_space<vmem>>) attributes {dimension_semantics = [#tpu.dimension_semantics<parallel>], iteration_bounds = array<i64: 1>, scalar_prefetch = 0 : i64, scratch_operands = 0 : i64, tpu.core_type = #tpu.core_type<tc>, window_params = [{pipeline_mode = #tpu.pipeline_mode<synchronous>, transform_indices = @transform_0, window_bounds = array<i64: 1, 1024>}, {transform_indices = @transform_1, window_bounds = array<i64: 2, 1024>}, {transform_indices = @transform_2, window_bounds = array<i64: 2, 1024>}]} {
    %c0 = arith.constant 0 : index
    %c0_0 = arith.constant 0 : index
    %0 = vector.load %arg2[%c0, %c0_0] : memref<2x1024xf32, #tpu.memory_space<vmem>>, vector<2x1024xf32>
    %c0_1 = arith.constant 0 : index
    %c0_2 = arith.constant 0 : index
    %1 = vector.load %arg1[%c0_1, %c0_2] : memref<1x1024xf32, #tpu.memory_space<vmem>>, vector<1x1024xf32>
    %cst = arith.constant 5.000000e-01 : f32
    %2 = vector.broadcast %cst : f32 to vector<2x1024xf32>
    %3 = arith.mulf %2, %0 : vector<2x1024xf32>
    %cst_3 = arith.constant 5.000000e-01 : f32
    %4 = vector.broadcast %cst_3 : f32 to vector<1x1024xf32>
    %5 = arith.mulf %4, %1 : vector<1x1024xf32>
    %6 = vector.broadcast %5 : vector<1x1024xf32> to vector<2x1024xf32>
    %7 = arith.mulf %6, %0 : vector<2x1024xf32>
    %8 = math.tanh %7 : vector<2x1024xf32>
    %cst_4 = arith.constant 1.000000e+00 : f32
    %9 = vector.broadcast %cst_4 : f32 to vector<2x1024xf32>
    %10 = arith.addf %9, %8 : vector<2x1024xf32>
    %11 = arith.mulf %3, %10 : vector<2x1024xf32>
    %c0_5 = arith.constant 0 : index
    %c0_6 = arith.constant 0 : index
    %12 = vector.load %arg3[%c0_5, %c0_6] : memref<2x1024xf32, #tpu.memory_space<vmem>>, vector<2x1024xf32>
    tpu.vector_store %arg3[%c0_5, %c0_6], %11 {strides = array<i32>} : memref<2x1024xf32, #tpu.memory_space<vmem>>, vector<2x1024xf32>,
    return
  }
  func.func @transform_0(%arg0: i32) -> (i32, i32) {
    %c0_i32 = arith.constant 0 : i32
    %c0_i32_0 = arith.constant 0 : i32
    %c0_i32_1 = arith.constant 0 : i32
    return %c0_i32, %c0_i32_0 : i32, i32
  }
  func.func @transform_1(%arg0: i32) -> (i32, i32) {
    %c0_i32 = arith.constant 0 : i32
    %c0_i32_0 = arith.constant 0 : i32
    return %arg0, %c0_i32 : i32, i32
  }
  func.func @transform_2(%arg0: i32) -> (i32, i32) {
    %c0_i32 = arith.constant 0 : i32
    %c0_i32_0 = arith.constant 0 : i32
    return %arg0, %c0_i32 : i32, i32
  }
}

</mosaic_0001>

<llo_original>
// kernel: tpu_custom_call.1
$region0: #{tpu_custom_call.1}
  #allocation0 [shape = 'u32[]', space=smem, size = 0x4, offset = 0x4, fixed_abs, tag = 'smem constant byte address 0x4 - core index']
  #allocation1 [shape = 'u32[72,128]{1,0:T(1,128)}', space=vmem, size = 0x9000, scoped, tag = 'internal scratch']
  %s0 = inlined_call_operand.hbm [shape: f32[1,1024], index: 0, kind: input, shape index: {}]
  %s1 = inlined_call_operand.hbm [shape: f32[2,1024], index: 1, kind: input, shape index: {}]
  %s2 = inlined_call_operand.hbm [shape: f32[2,1024], index: 2, kind: output, shape index: {}]
  %s3 = sld [smem:[#allocation0]]
  $region26: #{tpu_custom_call.1} parent=0
    _
  %s5 = ssub.s32 1, %s3
  %s6 = scalar_select 0, %s5, %s3
  $region1: #{tpu_custom_call.1} parent=0
    #allocation2 [shape = 'u8[4096]{0}', space=vmem, size = 0x1000, scoped, tag = 'input window, operand 0, single buffered']
    #allocation3 [shape = 's32[1]{0}', space=sflag, size = 0x4, scoped, tag = 'scoped memory for tpu_custom_call.1']
    #allocation4 [shape = 's32[1]{0}', space=sflag, size = 0x4, scoped, tag = 'scoped memory for tpu_custom_call.1']
    #allocation5 [shape = 'u8[8192]{0}', space=vmem, size = 0x2000, scoped, tag = 'input window, operand 1, single buffered']
    #allocation6 [shape = 's32[1]{0}', space=sflag, size = 0x4, scoped, tag = 'scoped memory for tpu_custom_call.1']
    #allocation7 [shape = 'u8[8192]{0}', space=vmem, size = 0x2000, scoped, tag = 'output window, operand 0, single buffered']
    %7 = vsyncpa [#allocation3], 0
    %8 = vsyncpa [#allocation6], 0
    %9 = vsyncpa [#allocation4], 0
    // Predicated region
    $region2: #{tpu_custom_call.1} parent=1 // pred_check
      _
    $region3: #{tpu_custom_call.1} parent=1 // pred_check_branch
      %11 = sbr.rel (0) target = $region5
    $region4: #{tpu_custom_call.1} parent=1 // pred_region
      %13 = vsyncadd [#allocation3], 0
      %s15 = sshll.u32 %s0, 4
      %s16 = int_to_ptr.hbm [resolvable:$true] %s15
      %s17 = sshll.u32 [#allocation2], 4
      %s18 = int_to_ptr.vmem [resolvable:$true] %s17
      %20 = dma.hbm_to_vmem [thread:$0]  %s16, 128, %s18, [#allocation3]
    $region5: #{tpu_custom_call.1} parent=1 // pred_fallthru
      _
    // Predicated region
    $region6: #{tpu_custom_call.1} parent=1 // pred_check
      _
    $region7: #{tpu_custom_call.1} parent=1 // pred_check_branch
      %22 = sbr.rel (0) target = $region9
    $region8: #{tpu_custom_call.1} parent=1 // pred_region
      %24 = vsyncadd [#allocation6], 0
      %s26 = sshll.u32 %s1, 4
      %s27 = int_to_ptr.hbm [resolvable:$true] %s26
      %s28 = sshll.u32 [#allocation5], 4
      %s29 = int_to_ptr.vmem [resolvable:$true] %s28
      %31 = dma.hbm_to_vmem [thread:$0]  %s27, 256, %s29, [#allocation6]
    $region9: #{tpu_custom_call.1} parent=1 // pred_fallthru
      _
    // Predicated region
    $region10: #{tpu_custom_call.1} parent=1 // pred_check
      _
    $region11: #{tpu_custom_call.1} parent=1 // pred_check_branch
      %33 = sbr.rel (0) target = $region13
    $region12: #{tpu_custom_call.1} parent=1 // pred_region
      %35 = dma.done [#allocation3], 128
    $region13: #{tpu_custom_call.1} parent=1 // pred_fallthru
      _
    // Predicated region
    $region14: #{tpu_custom_call.1} parent=1 // pred_check
      _
    $region15: #{tpu_custom_call.1} parent=1 // pred_check_branch
      %37 = sbr.rel (0) target = $region17
    $region16: #{tpu_custom_call.1} parent=1 // pred_region
      %39 = dma.done [#allocation6], 256
    $region17: #{tpu_custom_call.1} parent=1 // pred_fallthru
      _
    %v40 = vld [vmem:[#allocation5] sm:$0xff]
    %v41 = vld [vmem:[#allocation5 + $0x8] sm:$0xff]
    %v42 = vld [vmem:[#allocation2] sm:$0xff]
    %v43 = vmul.f32 %v40, 0.5
    %v44 = vmul.f32 %v41, 0.5
    %v45 = vmul.f32 %v42, 0.5
    %v47 = vperm.slane %v45, 0
    %v48 = vperm.slane %v45, 1
    %v49 = vperm.slane %v45, 2
    %v50 = vperm.slane %v45, 3
    %v51 = vperm.slane %v45, 4
    %v52 = vperm.slane %v45, 5
    %v53 = vperm.slane %v45, 6
    %v54 = vperm.slane %v45, 7
    %65 = vst [vmem:[#allocation1] ss:$4 sm:$0xff] %v40
    %s66 = scalar_lea.vmem [#allocation1], 32
    %67 = vst [vmem:[%s66] ss:$4 sm:$0xff] %v41
    %v68 = vld.sshfl [vmem:[#allocation1] sm:$0xff pattern:$0x73625140]
    %v69 = vld.sshfl [vmem:[#allocation1 + $0x8] sm:$0xff pattern:$0x73625140]
    %v70 = vld.sshfl [vmem:[#allocation1 + $0x10] sm:$0xff pattern:$0x73625140]
    %v71 = vld.sshfl [vmem:[#allocation1 + $0x18] sm:$0xff pattern:$0x73625140]
    %v72 = vld.sshfl [vmem:[#allocation1 + $0x20] sm:$0xff pattern:$0x73625140]
    %v73 = vld.sshfl [vmem:[#allocation1 + $0x28] sm:$0xff pattern:$0x73625140]
    %v74 = vld.sshfl [vmem:[#allocation1 + $0x30] sm:$0xff pattern:$0x73625140]
    %v75 = vld.sshfl [vmem:[#allocation1 + $0x38] sm:$0xff pattern:$0x73625140]
    %v84 = vmul.f32 %v47, %v68
    %v85 = vmul.f32 %v48, %v69
    %v86 = vmul.f32 %v49, %v70
    %v87 = vmul.f32 %v50, %v71
    %v88 = vmul.f32 %v51, %v72
    %v89 = vmul.f32 %v52, %v73
    %v90 = vmul.f32 %v53, %v74
    %v91 = vmul.f32 %v54, %v75
    %v92 = vtanh.pop %v84
    %v93 = vtanh.pop %v85
    %v94 = vtanh.pop %v86
    %v95 = vtanh.pop %v87
    %v96 = vtanh.pop %v88
    %v97 = vtanh.pop %v89
    %v98 = vtanh.pop %v90
    %v99 = vtanh.pop %v91
    %v100 = vadd.f32 %v92, 1.0
    %v101 = vadd.f32 %v93, 1.0
    %v102 = vadd.f32 %v94, 1.0
    %v103 = vadd.f32 %v95, 1.0
    %v104 = vadd.f32 %v96, 1.0
    %v105 = vadd.f32 %v97, 1.0
    %v106 = vadd.f32 %v98, 1.0
    %v107 = vadd.f32 %v99, 1.0
    %v116 = vrot.slane %v101, 6
    %v117 = vrot.slane %v102, 4
    %v118 = vrot.slane %v103, 2
    %v119 = vrot.slane %v105, 6
    %v120 = vrot.slane %v106, 4
    %v121 = vrot.slane %v107, 2
    %vm122 = vcmask 1041408
    %v123 = vsel %vm122, %v100, %v116
    %vm124 = vcmask 1045508
    %v125 = vsel %vm124, %v117, %v118
    %vm126 = vcmask 1043456
    %v127 = vsel %vm126, %v123, %v125
    %v128 = vsel %vm122, %v104, %v119
    %v129 = vsel %vm124, %v120, %v121
    %v130 = vsel %vm126, %v128, %v129
    %v133 = vmul.f32 %v43, %v127
    %v134 = vmul.f32 %v44, %v130
    %135 = vst [vmem:[#allocation7] sm:$0xff] %v133
    %136 = vst [vmem:[#allocation7 + $0x8] sm:$0xff] %v134
    // Predicated region
    $region18: #{tpu_custom_call.1} parent=1 // pred_check
      _
    $region19: #{tpu_custom_call.1} parent=1 // pred_check_branch
      %138 = sbr.rel (0) target = $region21
    $region20: #{tpu_custom_call.1} parent=1 // pred_region
      %140 = vsyncadd [#allocation4], 0
      %s142 = sshll.u32 [#allocation7], 4
      %s143 = int_to_ptr.vmem [resolvable:$true] %s142
      %s144 = sshll.u32 %s2, 4
      %s145 = int_to_ptr.hbm [resolvable:$true] %s144
      %147 = dma.vmem_to_hbm [thread:$0]  %s143, 256, %s145, [#allocation4]
    $region21: #{tpu_custom_call.1} parent=1 // pred_fallthru
      _
    // Predicated region
    $region22: #{tpu_custom_call.1} parent=1 // pred_check
      _
    $region23: #{tpu_custom_call.1} parent=1 // pred_check_branch
      %149 = sbr.rel (0) target = $region25
    $region24: #{tpu_custom_call.1} parent=1 // pred_region
      %151 = dma.done [#allocation4], 256
    $region25: #{tpu_custom_call.1} parent=1 // pred_fallthru
      _
    %152 = vsyncpa [#allocation3], 1
    %153 = vsyncpa [#allocation6], 1
    %154 = vsyncpa [#allocation4], 1

</llo_original>
